<compile_context>
chip_gen: v6e
topology: v6e:2x2x1
jax: 0.10.0
libtpu: 0.0.40
codegen_flags: <defaults>
</compile_context>

<pallas_src>
import functools
import math

import numpy as np
import jax
import jax.numpy as jnp
from jax import lax
from jax.experimental import pallas as pl
from jax.experimental.pallas import tpu as pltpu


def _round_up(x, m):
    return (x + m - 1) // m * m


# ---------------------------------------------------------------------------
# Kernel A: uniform random walks over CSR(rowptr, col); emit traversed edge
# ids (-1 where the current node has no out-edges).  Scalar SMEM-only kernel.
# ---------------------------------------------------------------------------
def _walk_kernel(rowptr_ref, col_ref, start_ref, rand_ref, eid_ref,
                 *, n_walkers, walk_length):
    """
    rowptr_ref : int32 [N+1]     CSR row pointers of the sorted edge_index
    col_ref    : int32 [E]       CSR column indices (sorted dst)
    start_ref  : int32 [W]       walk start nodes
    rand_ref   : int32 [W*L]     uniform ints in [0, 2^16), one per step
    eid_ref    : int32 [WL_pad]  out: traversed edge id per (walker, step),
                                 -1 for "no neighbour" / padding slots
    """
    # init (covers the rounding padding slots); WL_pad is tiny
    @pl.loop(0, eid_ref.shape[0])
    def _(i):
        eid_ref[i] = -1

    @pl.loop(0, n_walkers)
    def _(w):
        cur = start_ref[w]
        for t in range(walk_length):            # unrolled: walk_length is tiny
            idx = w * walk_length + t
            r = rand_ref[idx]
            rp = rowptr_ref[cur]
            dg = rowptr_ref[cur + 1] - rp
            has = dg > 0
            # uniform neighbour pick, pure int32 arithmetic: offset in [0, dg)
            # TODO(synk): r*dg needs widening for graphs with > 2^15 edges.
            e = rp + ((r * dg) >> 16)
            eid_ref[idx] = jnp.where(has, e, -1)
            nxt = col_ref[jnp.where(has, e, 0)]
            cur = jnp.where(has, nxt, cur)      # deg == 0: walker stays put


# ---------------------------------------------------------------------------
# Kernel B: dense adjacency counts of kept edges (edge-streamed, bf16 MXU,
# row-tiled so the resident output block stays VMEM-friendly and the row axis
# can be sharded across TensorCores).
# ---------------------------------------------------------------------------
def _adj_count_kernel(src_ref, dst_ref, keep_ref, adj_ref):
    """One grid step consumes TK edges for one TN-row slab of the output.

    src_ref  : int32 [1, TK]
    dst_ref  : int32 [TK, 1]   (pre-oriented in the wrapper -> no transpose)
    keep_ref : int32 [1, TK]
    adj_ref  : f32   [TN, N_pad]   resident across the edge ('arbitrary') axis
    """
    k = pl.program_id(1)

    @pl.when(k == 0)
    def _():
        adj_ref[...] = jnp.zeros_like(adj_ref)

    src = src_ref[...]                      # [1, TK]
    dst = dst_ref[...]                      # [TK, 1]
    keep = keep_ref[...]                    # [1, TK]
    tn, n_cols = adj_ref.shape
    tk = src.shape[1]

    row0 = pl.program_id(0) * tn
    # keep-masked source one-hot, LHS-oriented: [TN, TK]
    row_ids = lax.broadcasted_iota(jnp.int32, (tn, tk), 0) + row0
    s_ohT = ((row_ids == src) & (keep > 0)).astype(jnp.bfloat16)
    # destination one-hot, RHS-oriented (lane dim = nodes): [TK, N_pad]
    col_ids = lax.broadcasted_iota(jnp.int32, (tk, n_cols), 1)
    d_oh = (col_ids == dst).astype(jnp.bfloat16)

    # single bf16 MXU matmul per tile; f32 accumulation in the output block
    adj_ref[...] += jnp.dot(s_ohT, d_oh, preferred_element_type=jnp.float32)


# ---------------------------------------------------------------------------
# Wrapper mirroring MaskPath.forward
# ---------------------------------------------------------------------------
def mask_path(edge_index, *, p=0.7, walks_per_node=1, walk_length=3,
              num_nodes=None, undirected=True, training=True, key):
    if p < 0.0 or p > 1.0:
        raise ValueError(f"Sample probability has to be between 0 and 1 (got {p}")

    edge_index = jnp.asarray(edge_index, jnp.int32)
    assert edge_index.shape[0] == 2
    num_edges = int(edge_index.shape[1])
    n = int(num_nodes) if num_nodes is not None else int(jnp.max(edge_index)) + 1

    if not training or p == 0.0:
        return edge_index, jnp.ones((num_edges,), jnp.bool_)

    # ---- sort_edge_index (row-major) --------------------------------------
    # TODO(synk): no clean Pallas sort; done with jnp.argsort in the wrapper.
    order = jnp.argsort(edge_index[0] * n + edge_index[1])
    ei_sorted = edge_index[:, order]
    src, dst = ei_sorted[0], ei_sorted[1]

    # CSR structure for the walk (cheap O(N+E) wrapper-side jnp)
    deg = jnp.bincount(src, length=n).astype(jnp.int32)
    rowptr = jnp.concatenate(
        [jnp.zeros((1,), jnp.int32), jnp.cumsum(deg).astype(jnp.int32)])

    # start nodes + per-step random bits (deterministic jax.random stand-in
    # for torch randperm / torch-cluster random_walk RNG)
    k_start, k_rand = jax.random.split(key)
    n_start = int(round(n * p))
    n_walkers = n_start * walks_per_node

    e_pad = _round_up(max(num_edges, 1), 128)
    n_pad = _round_up(max(n, 1), 128)

    if n_walkers > 0 and num_edges > 0:
        start = jnp.tile(
            jax.random.permutation(k_start, n)[:n_start].astype(jnp.int32),
            walks_per_node)
        rand = jax.random.randint(
            k_rand, (n_walkers * walk_length,), 0, 65536, dtype=jnp.int32)
        wl_pad = _round_up(n_walkers * walk_length, 8)

        eids = pl.pallas_call(
            functools.partial(_walk_kernel, n_walkers=n_walkers,
                              walk_length=walk_length),
            out_shape=jax.ShapeDtypeStruct((wl_pad,), jnp.int32),
            in_specs=[pl.BlockSpec(memory_space=pltpu.MemorySpace.SMEM)] * 4,
            out_specs=pl.BlockSpec(memory_space=pltpu.MemorySpace.SMEM),
        )(rowptr, dst, start, rand)

        # build the keep mask with one tiny O(W*L) scatter (dummy slot absorbs
        # the -1 "no neighbour" entries)
        valid = eids >= 0
        scatter_idx = jnp.where(valid, eids, num_edges)
        keep = (jnp.ones((num_edges + 1,), jnp.bool_)
                .at[scatter_idx].set(False))[:num_edges]
    else:
        keep = jnp.ones((num_edges,), jnp.bool_)

    # ---- host glue: data-dependent-length edge extraction -----------------
    keep_bool = np.asarray(keep).astype(bool)
    ei_sorted_np = np.asarray(ei_sorted)
    masked_edges = jnp.asarray(ei_sorted_np[:, ~keep_bool], jnp.int32)

    if not undirected:
        remaining_edges = jnp.asarray(ei_sorted_np[:, keep_bool], jnp.int32)
        return remaining_edges, masked_edges

    # ---- adjacency counts of kept edges (Pallas, row x edge tiled) --------
    pad = e_pad - num_edges
    src_p = jnp.pad(src, (0, pad)).reshape(1, e_pad)
    dst_p = jnp.pad(dst, (0, pad)).reshape(e_pad, 1)
    keep_2d = jnp.pad(keep.astype(jnp.int32), (0, pad)).reshape(1, e_pad)

    tk = math.gcd(e_pad, 512)     # edge tile: multiple of 128, divides E_pad
    tn = math.gcd(n_pad, 256)     # row tile:  multiple of 128, divides N_pad
    adj = pl.pallas_call(
        _adj_count_kernel,
        out_shape=jax.ShapeDtypeStruct((n_pad, n_pad), jnp.float32),
        grid=(n_pad // tn, e_pad // tk),
        in_specs=[
            pl.BlockSpec((1, tk), lambda i, k: (0, k)),
            pl.BlockSpec((tk, 1), lambda i, k: (k, 0)),
            pl.BlockSpec((1, tk), lambda i, k: (0, k)),
        ],
        out_specs=pl.BlockSpec((tn, n_pad), lambda i, k: (i, 0)),
        compiler_params=pltpu.CompilerParams(
            dimension_semantics=("parallel", "arbitrary")),
    )(src_p, dst_p, keep_2d)

    # host glue: to_undirected + coalesce == symmetrize + binarize; done on
    # the host alongside the (data-dependent-length) nonzero().  np.nonzero
    # row-major order matches PyG coalesce order.
    a = np.asarray(adj)[:n, :n]
    a = np.maximum(a, a.T)
    rows, cols = np.nonzero(a)
    remaining_edges = jnp.asarray(np.stack([rows, cols]).astype(np.int32))
    return remaining_edges, masked_edges


if __name__ == "__main__":
    P = 0.7
    WALKS_PER_NODE = 1
    WALK_LENGTH = 3
    NUM_NODES = 16
    NUM_EDGES = 64

    root = jax.random.PRNGKey(0)
    k_edges, k_walk = jax.random.split(root)

    edge_index = jax.random.randint(
        k_edges, (2, NUM_EDGES), 0, NUM_NODES, dtype=jnp.int32)

    remaining_edges, masked_edges = mask_path(
        edge_index, p=P, walks_per_node=WALKS_PER_NODE,
        walk_length=WALK_LENGTH, num_nodes=NUM_NODES, key=k_walk)
    jax.block_until_ready((remaining_edges, masked_edges))

    # ---------------- numpy reference (same RNG draws, same arithmetic) ----
    ei = np.asarray(edge_index)
    order = np.argsort(ei[0] * NUM_NODES + ei[1], kind="stable")
    src_s, dst_s = ei[0][order], ei[1][order]
    deg = np.bincount(src_s, minlength=NUM_NODES)
    rowptr = np.concatenate([[0], np.cumsum(deg)]).astype(np.int64)

    k_start, k_rand = jax.random.split(k_walk)
    n_start = int(round(NUM_NODES * P))
    n_walkers = n_start * WALKS_PER_NODE
    start = np.tile(
        np.asarray(jax.random.permutation(k_start, NUM_NODES))[:n_start],
        WALKS_PER_NODE)
    rand = np.asarray(jax.random.randint(
        k_rand, (n_walkers * WALK_LENGTH,), 0, 65536, dtype=jnp.int32))

    keep_ref = np.ones(NUM_EDGES, bool)
    for w in range(n_walkers):
        cur = int(start[w])
        for t in range(WALK_LENGTH):
            r = int(rand[w * WALK_LENGTH + t])
            d = int(rowptr[cur + 1] - rowptr[cur])
            if d > 0:
                e = int(rowptr[cur]) + ((r * d) >> 16)
                keep_ref[e] = False
                cur = int(dst_s[e])

    ref_masked = np.stack([src_s[~keep_ref], dst_s[~keep_ref]]).astype(np.int32)
    A = np.zeros((NUM_NODES, NUM_NODES), np.float32)
    A[src_s[keep_ref], dst_s[keep_ref]] = 1.0
    A = np.maximum(A, A.T)
    rr, cc = np.nonzero(A)
    ref_remaining = np.stack([rr, cc]).astype(np.int32)

    assert np.array_equal(np.asarray(masked_edges), ref_masked), "masked_edges mismatch"
    assert np.array_equal(np.asarray(remaining_edges), ref_remaining), "remaining_edges mismatch"

    print("KERNEL_OK")
</pallas_src>

<mosaic_0001>
module attributes {stable_mosaic.version = 11 : i64} {
  func.func @_walk_kernel(%arg0: memref<17xi32, #tpu.memory_space<smem>>, %arg1: memref<64xi32, #tpu.memory_space<smem>>, %arg2: memref<11xi32, #tpu.memory_space<smem>>, %arg3: memref<33xi32, #tpu.memory_space<smem>>, %arg4: memref<40xi32, #tpu.memory_space<smem>>) attributes {dimension_semantics = [], scalar_prefetch = 0 : i64, scratch_operands = 0 : i64, tpu.core_type = #tpu.core_type<tc>} {
    %c0_i32 = arith.constant 0 : i32
    %c40_i32 = arith.constant 40 : i32
    %0 = arith.addi %c0_i32, %c40_i32 : i32
    %c1_i32 = arith.constant 1 : i32
    scf.for %arg5 = %c0_i32 to %0 step %c1_i32  : i32 {
      %c1_i32_4 = arith.constant 1 : i32
      %2 = arith.muli %arg5, %c1_i32_4 : i32
      %c0_i32_5 = arith.constant 0 : i32
      %3 = arith.addi %c0_i32_5, %2 : i32
      %c-1_i32 = arith.constant -1 : i32
      %4 = arith.index_cast %3 : i32 to index
      %5 = memref.load %arg4[%4] : memref<40xi32, #tpu.memory_space<smem>>
      memref.store %c-1_i32, %arg4[%4] : memref<40xi32, #tpu.memory_space<smem>>
    }
    %c40_i32_0 = arith.constant 40 : i32
    %c0_i32_1 = arith.constant 0 : i32
    %c11_i32 = arith.constant 11 : i32
    %1 = arith.addi %c0_i32_1, %c11_i32 : i32
    %c1_i32_2 = arith.constant 1 : i32
    scf.for %arg5 = %c0_i32_1 to %1 step %c1_i32_2  : i32 {
      %c1_i32_4 = arith.constant 1 : i32
      %2 = arith.muli %arg5, %c1_i32_4 : i32
      %c0_i32_5 = arith.constant 0 : i32
      %3 = arith.addi %c0_i32_5, %2 : i32
      %4 = arith.index_cast %3 : i32 to index
      %5 = memref.load %arg2[%4] : memref<11xi32, #tpu.memory_space<smem>>
      %c3_i32 = arith.constant 3 : i32
      %6 = arith.muli %3, %c3_i32 : i32
      %c0_i32_6 = arith.constant 0 : i32
      %7 = arith.addi %6, %c0_i32_6 : i32
      %8 = arith.index_cast %7 : i32 to index
      %9 = memref.load %arg3[%8] : memref<33xi32, #tpu.memory_space<smem>>
      %10 = arith.index_cast %5 : i32 to index
      %11 = memref.load %arg0[%10] : memref<17xi32, #tpu.memory_space<smem>>
      %c1_i32_7 = arith.constant 1 : i32
      %12 = arith.addi %5, %c1_i32_7 : i32
      %13 = arith.index_cast %12 : i32 to index
      %14 = memref.load %arg0[%13] : memref<17xi32, #tpu.memory_space<smem>>
      %15 = arith.subi %14, %11 : i32
      %c0_i32_8 = arith.constant 0 : i32
      %16 = arith.cmpi sgt, %15, %c0_i32_8 : i32
      %17 = arith.muli %9, %15 : i32
      %c16_i32 = arith.constant 16 : i32
      %18 = arith.shrsi %17, %c16_i32 : i32
      %19 = arith.addi %11, %18 : i32
      %c-1_i32 = arith.constant -1 : i32
      %20 = arith.select %16, %19, %c-1_i32 : i32
      %21 = arith.index_cast %7 : i32 to index
      %22 = memref.load %arg4[%21] : memref<40xi32, #tpu.memory_space<smem>>
      memref.store %20, %arg4[%21] : memref<40xi32, #tpu.memory_space<smem>>
      %c0_i32_9 = arith.constant 0 : i32
      %23 = arith.select %16, %19, %c0_i32_9 : i32
      %24 = arith.index_cast %23 : i32 to index
      %25 = memref.load %arg1[%24] : memref<64xi32, #tpu.memory_space<smem>>
      %26 = arith.select %16, %25, %5 : i32
      %c3_i32_10 = arith.constant 3 : i32
      %27 = arith.muli %3, %c3_i32_10 : i32
      %c1_i32_11 = arith.constant 1 : i32
      %28 = arith.addi %27, %c1_i32_11 : i32
      %29 = arith.index_cast %28 : i32 to index
      %30 = memref.load %arg3[%29] : memref<33xi32, #tpu.memory_space<smem>>
      %31 = arith.index_cast %26 : i32 to index
      %32 = memref.load %arg0[%31] : memref<17xi32, #tpu.memory_space<smem>>
      %c1_i32_12 = arith.constant 1 : i32
      %33 = arith.addi %26, %c1_i32_12 : i32
      %34 = arith.index_cast %33 : i32 to index
      %35 = memref.load %arg0[%34] : memref<17xi32, #tpu.memory_space<smem>>
      %36 = arith.subi %35, %32 : i32
      %c0_i32_13 = arith.constant 0 : i32
      %37 = arith.cmpi sgt, %36, %c0_i32_13 : i32
      %38 = arith.muli %30, %36 : i32
      %c16_i32_14 = arith.constant 16 : i32
      %39 = arith.shrsi %38, %c16_i32_14 : i32
      %40 = arith.addi %32, %39 : i32
      %c-1_i32_15 = arith.constant -1 : i32
      %41 = arith.select %37, %40, %c-1_i32_15 : i32
      %42 = arith.index_cast %28 : i32 to index
      %43 = memref.load %arg4[%42] : memref<40xi32, #tpu.memory_space<smem>>
      memref.store %41, %arg4[%42] : memref<40xi32, #tpu.memory_space<smem>>
      %c0_i32_16 = arith.constant 0 : i32
      %44 = arith.select %37, %40, %c0_i32_16 : i32
      %45 = arith.index_cast %44 : i32 to index
      %46 = memref.load %arg1[%45] : memref<64xi32, #tpu.memory_space<smem>>
      %47 = arith.select %37, %46, %26 : i32
      %c3_i32_17 = arith.constant 3 : i32
      %48 = arith.muli %3, %c3_i32_17 : i32
      %c2_i32 = arith.constant 2 : i32
      %49 = arith.addi %48, %c2_i32 : i32
      %50 = arith.index_cast %49 : i32 to index
      %51 = memref.load %arg3[%50] : memref<33xi32, #tpu.memory_space<smem>>
      %52 = arith.index_cast %47 : i32 to index
      %53 = memref.load %arg0[%52] : memref<17xi32, #tpu.memory_space<smem>>
      %c1_i32_18 = arith.constant 1 : i32
      %54 = arith.addi %47, %c1_i32_18 : i32
      %55 = arith.index_cast %54 : i32 to index
      %56 = memref.load %arg0[%55] : memref<17xi32, #tpu.memory_space<smem>>
      %57 = arith.subi %56, %53 : i32
      %c0_i32_19 = arith.constant 0 : i32
      %58 = arith.cmpi sgt, %57, %c0_i32_19 : i32
      %59 = arith.muli %51, %57 : i32
      %c16_i32_20 = arith.constant 16 : i32
      %60 = arith.shrsi %59, %c16_i32_20 : i32
      %61 = arith.addi %53, %60 : i32
      %c-1_i32_21 = arith.constant -1 : i32
      %62 = arith.select %58, %61, %c-1_i32_21 : i32
      %63 = arith.index_cast %49 : i32 to index
      %64 = memref.load %arg4[%63] : memref<40xi32, #tpu.memory_space<smem>>
      memref.store %62, %arg4[%63] : memref<40xi32, #tpu.memory_space<smem>>
    }
    %c11_i32_3 = arith.constant 11 : i32
    return
  }
}

</mosaic_0001>

<llo_original>
// kernel: tpu_custom_call.1
$region0: #{tpu_custom_call.1}
  #allocation0 [shape = 'u32[]', space=smem, size = 0x4, offset = 0x4, fixed_abs, tag = 'smem constant byte address 0x4 - core index']
  #allocation1 [shape = 'u32[144,128]{1,0:T(1,128)}', space=vmem, size = 0x12000, scoped, tag = 'internal scratch']
  %s0 = inlined_call_operand.hbm [shape: s32[17], index: 0, kind: input, shape index: {}]
  %s1 = inlined_call_operand.vmem [shape: s32[64], index: 1, kind: input, shape index: {}]
  %s2 = inlined_call_operand.vmem [shape: s32[11], index: 2, kind: input, shape index: {}]
  %s3 = inlined_call_operand.vmem [shape: s32[33], index: 3, kind: input, shape index: {}]
  %s4 = inlined_call_operand.hbm [shape: s32[40], index: 4, kind: output, shape index: {}]
  %s5 = sld [smem:[#allocation0]]
  $region56: #{tpu_custom_call.1} parent=0
    _
  %s7 = ssub.s32 1, %s5
  %s8 = scalar_select 0, %s7, %s5
  $region1: #{tpu_custom_call.1} parent=0
    #allocation2 [shape = 'u8[512]{0}', space=smem, size = 0x200, scoped, tag = 'input window, operand 0, single buffered']
    #allocation3 [shape = 's32[1]{0}', space=sflag, size = 0x4, scoped, tag = 'scoped memory for tpu_custom_call.1']
    #allocation4 [shape = 's32[1]{0}', space=sflag, size = 0x4, scoped, tag = 'scoped memory for tpu_custom_call.1']
    #allocation5 [shape = 's32[1]{0}', space=sflag, size = 0x4, scoped, tag = 'scoped memory for tpu_custom_call.1']
    #allocation6 [shape = 'u8[512]{0}', space=smem, size = 0x200, scoped, tag = 'input window, operand 1, single buffered']
    #allocation7 [shape = 'u8[512]{0}', space=smem, size = 0x200, scoped, tag = 'input window, operand 2, single buffered']
    #allocation8 [shape = 's32[1]{0}', space=sflag, size = 0x4, scoped, tag = 'scoped memory for tpu_custom_call.1']
    #allocation9 [shape = 'u8[512]{0}', space=smem, size = 0x200, scoped, tag = 'input window, operand 3, single buffered']
    #allocation10 [shape = 'u8[512]{0}', space=smem, size = 0x200, scoped, tag = 'output window, operand 0, single buffered']
    %9 = vsyncpa [#allocation3], 0
    %10 = vsyncpa [#allocation5], 0
    %11 = vsyncpa [#allocation8], 0
    %12 = vsyncpa [#allocation4], 0
    // Predicated region
    $region2: #{tpu_custom_call.1} parent=1 // pred_check
      _
    $region3: #{tpu_custom_call.1} parent=1 // pred_check_branch
      %14 = sbr.rel (0) target = $region5
    $region4: #{tpu_custom_call.1} parent=1 // pred_region
      %s16 = ssub.s32 16, 16
      %17 = vsyncadd [#allocation3], %s16
      %20 = dma.hbm_to_smem %s0, 16, [#allocation2], [#allocation3]
    $region5: #{tpu_custom_call.1} parent=1 // pred_fallthru
      _
    // Predicated region
    $region6: #{tpu_custom_call.1} parent=1 // pred_check
      _
    $region7: #{tpu_custom_call.1} parent=1 // pred_check_branch
      %22 = sbr.rel (0) target = $region9
    $region8: #{tpu_custom_call.1} parent=1 // pred_region
      %s24 = ssub.s32 16, 16
      %25 = vsyncadd [#allocation5], %s24
      %s27 = sshll.u32 %s1, 4
      %s28 = int_to_ptr.vmem [resolvable:$true] %s27
      %30 = dma.vmem_to_smem %s28, 16, [#allocation6], [#allocation5]
    $region9: #{tpu_custom_call.1} parent=1 // pred_fallthru
      _
    // Predicated region
    $region10: #{tpu_custom_call.1} parent=1 // pred_check
      _
    $region11: #{tpu_custom_call.1} parent=1 // pred_check_branch
      %32 = sbr.rel (0) target = $region13
    $region12: #{tpu_custom_call.1} parent=1 // pred_region
      %s34 = ssub.s32 16, 16
      %35 = vsyncadd [#allocation8], %s34
      %s37 = sshll.u32 %s2, 4
      %s38 = int_to_ptr.vmem [resolvable:$true] %s37
      %40 = dma.vmem_to_smem %s38, 16, [#allocation7], [#allocation8]
    $region13: #{tpu_custom_call.1} parent=1 // pred_fallthru
      _
    // Predicated region
    $region14: #{tpu_custom_call.1} parent=1 // pred_check
      _
    $region15: #{tpu_custom_call.1} parent=1 // pred_check_branch
      %42 = sbr.rel (0) target = $region17
    $region16: #{tpu_custom_call.1} parent=1 // pred_region
      %s44 = ssub.s32 16, 16
      %45 = vsyncadd [#allocation8], %s44
      %s47 = sshll.u32 %s3, 4
      %s48 = int_to_ptr.vmem [resolvable:$true] %s47
      %50 = dma.vmem_to_smem %s48, 16, [#allocation9], [#allocation8]
    $region17: #{tpu_custom_call.1} parent=1 // pred_fallthru
      _
    // Predicated region
    $region18: #{tpu_custom_call.1} parent=1 // pred_check
      _
    $region19: #{tpu_custom_call.1} parent=1 // pred_check_branch
      %52 = sbr.rel (0) target = $region21
    $region20: #{tpu_custom_call.1} parent=1 // pred_region
      %53 = dma.done [#allocation3], 16
    $region21: #{tpu_custom_call.1} parent=1 // pred_fallthru
      _
    // Predicated region
    $region22: #{tpu_custom_call.1} parent=1 // pred_check
      _
    $region23: #{tpu_custom_call.1} parent=1 // pred_check_branch
      %55 = sbr.rel (0) target = $region25
    $region24: #{tpu_custom_call.1} parent=1 // pred_region
      %56 = dma.done [#allocation5], 16
    $region25: #{tpu_custom_call.1} parent=1 // pred_fallthru
      _
    // Predicated region
    $region26: #{tpu_custom_call.1} parent=1 // pred_check
      _
    $region27: #{tpu_custom_call.1} parent=1 // pred_check_branch
      %58 = sbr.rel (0) target = $region29
    $region28: #{tpu_custom_call.1} parent=1 // pred_region
      %59 = dma.done [#allocation8], 16
    $region29: #{tpu_custom_call.1} parent=1 // pred_fallthru
      _
    // Predicated region
    $region30: #{tpu_custom_call.1} parent=1 // pred_check
      _
    $region31: #{tpu_custom_call.1} parent=1 // pred_check_branch
      %61 = sbr.rel (0) target = $region33
    $region32: #{tpu_custom_call.1} parent=1 // pred_region
      %62 = dma.done [#allocation8], 16
    $region33: #{tpu_custom_call.1} parent=1 // pred_fallthru
      _
    %63 = sfence
    loop: start=0, step=1, limit=40
    $region34: #{tpu_custom_call.1} parent=1 // loop_pre_header
      _
    $region35: #{tpu_custom_call.1} parent=1 // loop_header
      %s65 = sphi 0, %s69
      %p66 = scmp.ge.s32.totalorder %s65, 40
    $region36: #{tpu_custom_call.1} parent=1 // loop_header_branch
      %68 = sbr.rel (%p66) target = $region40
    $region37: #{tpu_custom_call.1} parent=1 // loop_body
      %s70 = scalar_lea.smem [#allocation10], %s65
      %71 = sst [smem:[%s70]] 4294967295
    $region38: #{tpu_custom_call.1} parent=1 // loop_footer
      %s69 = sadd.s32 1, %s65
    $region39: #{tpu_custom_call.1} parent=1 // loop_footer_branch
      %64 = sbr.rel target = $region35
    $region40: #{tpu_custom_call.1} parent=1 // loop_exit
      _
    loop: start=0, step=1, limit=11
    $region41: #{tpu_custom_call.1} parent=1 // loop_pre_header
      _
    $region42: #{tpu_custom_call.1} parent=1 // loop_header
      %s73 = sphi 0, %s77
      %p74 = scmp.ge.s32.totalorder %s73, 11
    $region43: #{tpu_custom_call.1} parent=1 // loop_header_branch
      %76 = sbr.rel (%p74) target = $region47
    $region44: #{tpu_custom_call.1} parent=1 // loop_body
      %s78 = sld [smem:[#allocation7 + %s73]]
      %s79 = smul.u32 %s73, 3
      %s80 = sld [smem:[#allocation9 + %s79]]
      %s81 = sld [smem:[#allocation2 + %s78]]
      %s82 = sadd.s32 %s78, 1
      %s83 = sld [smem:[#allocation2 + %s82]]
      %s84 = ssub.s32 %s83, %s81
      %p85 = scmp.gt.s32.totalorder %s84, 0
      %s86 = smul.u32 %s80, %s84
      %s87 = sshra.s32 %s86, 16
      %s88 = sadd.s32 %s81, %s87
      %s89 = scalar_select %p85, %s88, 4294967295
      %s90 = scalar_lea.smem [#allocation10], %s79
      %91 = sst [smem:[%s90]] %s89
      %s92 = scalar_select %p85, %s88, 0
      %s93 = sld [smem:[#allocation6 + %s92]]
      %s94 = scalar_select %p85, %s93, %s78
      %s95 = sadd.s32 %s79, 1
      %s96 = sld [smem:[#allocation9 + %s95]]
      %s97 = sld [smem:[#allocation2 + %s94]]
      %s98 = sadd.s32 %s94, 1
      %s99 = sld [smem:[#allocation2 + %s98]]
      %s100 = ssub.s32 %s99, %s97
      %p101 = scmp.gt.s32.totalorder %s100, 0
      %s102 = smul.u32 %s96, %s100
      %s103 = sshra.s32 %s102, 16
      %s104 = sadd.s32 %s97, %s103
      %s105 = scalar_select %p101, %s104, 4294967295
      %s106 = scalar_lea.smem [#allocation10], %s95
      %107 = sst [smem:[%s106]] %s105
      %s108 = scalar_select %p101, %s104, 0
      %s109 = sld [smem:[#allocation6 + %s108]]
      %s110 = scalar_select %p101, %s109, %s94
      %s111 = sadd.s32 %s79, 2
      %s112 = sld [smem:[#allocation9 + %s111]]
      %s113 = sld [smem:[#allocation2 + %s110]]
      %s114 = sadd.s32 %s110, 1
      %s115 = sld [smem:[#allocation2 + %s114]]
      %s116 = ssub.s32 %s115, %s113
      %p117 = scmp.gt.s32.totalorder %s116, 0
      %s118 = smul.u32 %s112, %s116
      %s119 = sshra.s32 %s118, 16
      %s120 = sadd.s32 %s113, %s119
      %s121 = scalar_select %p117, %s120, 4294967295
      %s122 = scalar_lea.smem [#allocation10], %s111
      %123 = sst [smem:[%s122]] %s121
    $region45: #{tpu_custom_call.1} parent=1 // loop_footer
      %s77 = sadd.s32 1, %s73
    $region46: #{tpu_custom_call.1} parent=1 // loop_footer_branch
      %72 = sbr.rel target = $region42
    $region47: #{tpu_custom_call.1} parent=1 // loop_exit
      _
    // Predicated region
    $region48: #{tpu_custom_call.1} parent=1 // pred_check
      _
    $region49: #{tpu_custom_call.1} parent=1 // pred_check_branch
      %125 = sbr.rel (0) target = $region51
    $region50: #{tpu_custom_call.1} parent=1 // pred_region
      %s127 = ssub.s32 16, 16
      %128 = vsyncadd [#allocation4], %s127
      %131 = dma.smem_to_hbm [#allocation10], 16, %s4, [#allocation4]
    $region51: #{tpu_custom_call.1} parent=1 // pred_fallthru
      _
    // Predicated region
    $region52: #{tpu_custom_call.1} parent=1 // pred_check
      _
    $region53: #{tpu_custom_call.1} parent=1 // pred_check_branch
      %133 = sbr.rel (0) target = $region55
    $region54: #{tpu_custom_call.1} parent=1 // pred_region
      %134 = dma.done [#allocation4], 16
    $region55: #{tpu_custom_call.1} parent=1 // pred_fallthru
      _
    %135 = sfence
    %136 = vsyncpa [#allocation3], 1
    %137 = vsyncpa [#allocation4], 1
    %138 = vsyncpa [#allocation5], 1
    %139 = vsyncpa [#allocation8], 1

</llo_original>
